<compile_context>
chip_gen: v5e
topology: v5e:2x2
jax: 0.10.0
libtpu: 0.0.40
codegen_flags: <defaults>
</compile_context>

<pallas_src>
import functools
import math

import jax
import jax.numpy as jnp
from jax.experimental import pallas as pl
from jax.experimental.pallas import tpu as pltpu


# -----------------------------------------------------------------------------
# Kernel 1: per-batch prototypes + normalized prototypes.  grid = (B,)
# -----------------------------------------------------------------------------
def proto_kernel(key_ref, w_ref, protos_ref, keysn_ref, *, eps):
    key = key_ref[0]                              # (D, N)  spatial axis lane-dense
    w = w_ref[...]                                # (P, D)  torch nn.Linear layout

    # Mheads linear, channel-major: (P, N)
    mhw = jnp.dot(w, key, preferred_element_type=jnp.float32)

    # softmax over the spatial axis (torch softmax(dim=1) on the (B,N,P,1) view)
    mhw = mhw - jnp.max(mhw, axis=-1, keepdims=True)
    e = jnp.exp(mhw)
    attn = e / jnp.sum(e, axis=-1, keepdims=True)          # exact division

    # protos[p, d] = sum_n attn[p, n] * key[d, n]
    protos = jnp.einsum('pn,dn->pd', attn.astype(key.dtype), key,
                        preferred_element_type=jnp.float32)
    protos_ref[0] = protos.astype(protos_ref.dtype)

    # keys_n = F.normalize(protos, dim=-1)  (x / max(||x||, eps))
    ssq = jnp.sum(protos * protos, axis=-1, keepdims=True)
    keysn_ref[0] = (protos * jax.lax.rsqrt(jnp.maximum(ssq, eps * eps))
                    ).astype(keysn_ref.dtype)


# -----------------------------------------------------------------------------
# Kernel 2: attention / new_query + fea_loss partials.  grid = (B, Nq_tiles)
# -----------------------------------------------------------------------------
def attn_kernel(kn_ref, knt_ref, q_ref, upd_ref, fea_ref, *, eps):
    kn = kn_ref[0]                                # (P, D)  compute dtype (pre-cast)
    knt = knt_ref[0]                              # (D, P)  pre-transposed copy
    q = q_ref[0]                                  # (D, TQ) compute dtype

    # score[p, t] = <keys_n[p, :], q[:, t]>
    score = jnp.dot(kn, q, preferred_element_type=jnp.float32)       # (P, TQ)

    # softmax over prototypes (torch softmax(dim=2) of the (B, Nq, P) score)
    mx = jnp.max(score, axis=0, keepdims=True)                       # (1, TQ)
    e = jnp.exp(score - mx)
    sproto = e / jnp.sum(e, axis=0, keepdims=True)                   # (P, TQ)

    # new_query[d, t] = sum_p keys_n[p, d] * sproto[p, t]; L2-normalize over d
    new_q = jnp.dot(knt, sproto.astype(knt.dtype),
                    preferred_element_type=jnp.float32)              # (D, TQ)
    nsq = jnp.sum(new_q * new_q, axis=0, keepdims=True)
    new_q = new_q * jax.lax.rsqrt(jnp.maximum(nsq, eps * eps))

    qf = q.astype(jnp.float32)
    upd_ref[0] = (new_q + qf).astype(upd_ref.dtype)   # lane-dense full-width store

    # fea partial: sum_t ( ||q_t||^2 - 2*max_p score[p,t] + ||pos_t||^2 ),
    # with ||pos_t||^2 == 1 because keys_n is L2-normalized (see TODO above).
    per_t = jnp.sum(qf * qf, axis=0, keepdims=True) - 2.0 * mx + 1.0  # (1, TQ)
    fea_ref[0, 0] = jnp.sum(per_t, axis=1, keepdims=True)             # (1, 1)


# -----------------------------------------------------------------------------
# Helpers
# -----------------------------------------------------------------------------
def _vmem_limit_bytes(default_bytes=64 * 1024 * 1024):
    """3/4 of physical VMEM if queryable (128 MiB v5e/v6e, 64 MiB v7x)."""
    try:
        cap = int(pltpu.get_tpu_info().vmem_capacity_bytes)
        return max(32 * 1024 * 1024, (cap * 3) // 4)
    except Exception:
        return default_bytes


def _pick_query_tile(nq, max_tile):
    """Largest Nq tile that is a multiple of 128 and divides Nq (or full Nq)."""
    if nq <= max_tile:
        return nq
    t = (max_tile // 128) * 128
    while t >= 128:
        if nq % t == 0:
            return t
        t -= 128
    return nq


# -----------------------------------------------------------------------------
# Forward wrapper
# -----------------------------------------------------------------------------
def meta_prototype_forward(key_nchw, query_nchw, mheads_weight, *,
                           query_tile=None, compute_dtype=None):
    """key_nchw: (B, key_dim, h, w); query_nchw: (B, feature_dim, h_, w_);
    mheads_weight: (proto_size, key_dim) (PyTorch nn.Linear layout).
    compute_dtype: e.g. jnp.bfloat16 to halve HBM traffic (f32 accumulation kept)."""
    B, D, H, W = key_nchw.shape
    _, Dq, Hq, Wq = query_nchw.shape
    assert D == Dq, "key_dim must equal feature_dim (bmm requires it)"
    P = mheads_weight.shape[0]
    N, Nq = H * W, Hq * Wq

    # Channel-major flatten: pure reshape (same spatial ordering n = h*W + w as
    # the torch permute(0,2,3,1).reshape path), no HBM transpose.
    key_cm = key_nchw.reshape(B, D, N)
    query_cm = query_nchw.reshape(B, D, Nq)
    w = mheads_weight
    if compute_dtype is not None:
        key_cm = key_cm.astype(compute_dtype)
        query_cm = query_cm.astype(compute_dtype)
        w = w.astype(compute_dtype)

    eps = 1e-12                                   # F.normalize default eps
    vmem_limit = _vmem_limit_bytes()

    # ---------------- kernel 1: prototypes (grid over batch, parallel) -------
    protos, keys_n = pl.pallas_call(
        functools.partial(proto_kernel, eps=eps),
        out_shape=(
            jax.ShapeDtypeStruct((B, P, D), key_cm.dtype),   # protos (unnormalized)
            jax.ShapeDtypeStruct((B, P, D), jnp.float32),    # keys_n (normalized)
        ),
        grid_spec=pltpu.PrefetchScalarGridSpec(
            num_scalar_prefetch=0,
            grid=(B,),
            in_specs=[
                pl.BlockSpec((1, D, N), lambda b: (b, 0, 0)),   # key  (B, D, N)
                pl.BlockSpec((P, D), lambda b: (0, 0)),         # Mheads weight
            ],
            out_specs=(
                pl.BlockSpec((1, P, D), lambda b: (b, 0, 0)),
                pl.BlockSpec((1, P, D), lambda b: (b, 0, 0)),
            ),
        ),
        compiler_params=pltpu.CompilerParams(
            dimension_semantics=("parallel",),
            vmem_limit_bytes=vmem_limit,
        ),
    )(key_cm, w)

    # ---------------- tiny per-batch losses in plain JAX ---------------------
    diff = keys_n[:, None, :, :] - keys_n[:, :, None, :]           # (B, P, P, D)
    d2 = jnp.sum(diff * diff, axis=-1)                             # (B, P, P)
    dis = 1.0 - d2
    dis = jnp.where(dis > 0.0, dis, 0.0)
    dis = jnp.where(jnp.triu(jnp.ones((P, P), dtype=bool), k=1)[None], dis, 0.0)
    dis_loss = jnp.mean(jnp.sum(dis, axis=(1, 2)) * 2.0 / (P * (P - 1)))

    # cst_loss: NaN for B == 1 (mean of empty), matching the torch reference.
    cst_loss = jnp.mean(
        jnp.sum((keys_n[1:] - keys_n[:-1]) ** 2, axis=-1)).reshape(1)

    # ---------------- kernel 2: attention / new_query (fully parallel grid) --
    if query_tile is None:
        query_tile = 2048 if vmem_limit >= (80 << 20) else 512
    tq = _pick_query_tile(Nq, query_tile)
    nqt = Nq // tq

    keysn_c = keys_n.astype(query_cm.dtype)         # hoisted per-tile cast
    keysn_t = jnp.swapaxes(keysn_c, 1, 2)           # hoisted per-tile transpose

    upd, fea_parts = pl.pallas_call(
        functools.partial(attn_kernel, eps=eps),
        out_shape=(
            jax.ShapeDtypeStruct((B, D, Nq), query_cm.dtype),    # updated query
            jax.ShapeDtypeStruct((B, nqt, 1, 1), jnp.float32),   # fea partials
        ),
        grid_spec=pltpu.PrefetchScalarGridSpec(
            num_scalar_prefetch=0,
            grid=(B, nqt),
            in_specs=[
                pl.BlockSpec((1, P, D), lambda b, t: (b, 0, 0)),   # keys_n
                pl.BlockSpec((1, D, P), lambda b, t: (b, 0, 0)),   # keys_n^T
                pl.BlockSpec((1, D, tq), lambda b, t: (b, 0, t)),  # query tile
            ],
            out_specs=(
                pl.BlockSpec((1, D, tq), lambda b, t: (b, 0, t)),
                pl.BlockSpec((1, 1, 1, 1), lambda b, t: (b, t, 0, 0)),
            ),
        ),
        compiler_params=pltpu.CompilerParams(
            # No cross-iteration deps -> both axes parallel (v7x megacore OK).
            dimension_semantics=("parallel", "parallel"),
            vmem_limit_bytes=vmem_limit,
        ),
    )(keysn_c, keysn_t, query_cm)

    fea_loss = jnp.sum(fea_parts) / (B * Nq * D)

    # (B, D, Nq) -> (B, D, h_, w_): pure reshape (no transpose needed).
    updated_query = upd.reshape(B, D, Hq, Wq)
    # Match torch return shapes: fea_loss scalar, cst_loss (1,), dis_loss scalar.
    return updated_query, protos, fea_loss, cst_loss, dis_loss


if __name__ == "__main__":
    # Small shapes consistent with the module (key_dim == feature_dim).
    B, C = 2, 32
    Hk, Wk = 16, 16
    Hq, Wq = 16, 16
    proto_size = 8

    k0, k1, k2 = jax.random.split(jax.random.PRNGKey(0), 3)
    key_in = jax.random.normal(k0, (B, C, Hk, Wk), jnp.float32)
    query_in = jax.random.normal(k1, (B, C, Hq, Wq), jnp.float32)
    # deterministic nn.Linear(key_dim, proto_size, bias=False)-style init
    bound = 1.0 / math.sqrt(C)
    mheads_w = jax.random.uniform(k2, (proto_size, C), jnp.float32, -bound, bound)

    outs = meta_prototype_forward(key_in, query_in, mheads_w)
    jax.block_until_ready(outs)

    updated_query, protos, fea_loss, cst_loss, dis_loss = outs
    assert updated_query.shape == (B, C, Hq, Wq)
    assert protos.shape == (B, proto_size, C)
    assert cst_loss.shape == (1,)
    assert bool(jnp.isfinite(fea_loss))
    assert bool(jnp.isfinite(dis_loss))
    assert bool(jnp.all(jnp.isfinite(updated_query)))
    print("KERNEL_OK")
</pallas_src>

<mosaic_0001>
module attributes {stable_mosaic.version = 11 : i64} {
  func.func @proto_kernel(%arg0: i32, %arg1: memref<1x32x256xf32, #tpu.memory_space<vmem>>, %arg2: memref<8x32xf32, #tpu.memory_space<vmem>>, %arg3: memref<1x8x32xf32, #tpu.memory_space<vmem>>, %arg4: memref<1x8x32xf32, #tpu.memory_space<vmem>>) attributes {dimension_semantics = [#tpu.dimension_semantics<parallel>], iteration_bounds = array<i64: 2>, scalar_prefetch = 0 : i64, scratch_operands = 0 : i64, tpu.core_type = #tpu.core_type<tc>, window_params = [{transform_indices = @transform_0, window_bounds = array<i64: 1, 32, 256>}, {pipeline_mode = #tpu.pipeline_mode<synchronous>, transform_indices = @transform_1, window_bounds = array<i64: 8, 32>}, {transform_indices = @transform_2, window_bounds = array<i64: 1, 8, 32>}, {transform_indices = @transform_3, window_bounds = array<i64: 1, 8, 32>}]} {
    %c0 = arith.constant 0 : index
    %c0_0 = arith.constant 0 : index
    %c0_1 = arith.constant 0 : index
    %0 = vector.load %arg1[%c0, %c0_0, %c0_1] : memref<1x32x256xf32, #tpu.memory_space<vmem>>, vector<1x32x256xf32>
    %1 = vector.shape_cast %0 : vector<1x32x256xf32> to vector<32x256xf32>
    %c0_2 = arith.constant 0 : index
    %c0_3 = arith.constant 0 : index
    %2 = vector.load %arg2[%c0_2, %c0_3] : memref<8x32xf32, #tpu.memory_space<vmem>>, vector<8x32xf32>
    %cst = arith.constant dense<0.000000e+00> : vector<8x256xf32>
    %3 = tpu.matmul %2, %1, %cst {dimension_numbers = #tpu.dot_dimension_numbers<[1], [0], [0], [1], [0, 0, 1, 1], [], []>} : vector<8x32xf32>, vector<32x256xf32>, vector<8x256xf32> -> vector<8x256xf32>
    %cst_4 = arith.constant dense<0xFF800000> : vector<8xf32>
    %4 = vector.multi_reduction <maximumf>, %3, %cst_4 [1] : vector<8x256xf32> to vector<8xf32>
    %5 = vector.shape_cast %4 : vector<8xf32> to vector<8x1xf32>
    %6 = vector.broadcast %5 : vector<8x1xf32> to vector<8x256xf32>
    %7 = arith.subf %3, %6 : vector<8x256xf32>
    %8 = math.exp %7 : vector<8x256xf32>
    %cst_5 = arith.constant dense<0.000000e+00> : vector<8xf32>
    %9 = vector.multi_reduction <add>, %8, %cst_5 [1] : vector<8x256xf32> to vector<8xf32>
    %10 = vector.shape_cast %9 : vector<8xf32> to vector<8x1xf32>
    %11 = vector.broadcast %10 : vector<8x1xf32> to vector<8x256xf32>
    %12 = arith.divf %8, %11 : vector<8x256xf32>
    "tpu.trace_start"() <{level = 10 : i32, message = "pn,dn->pd"}> : () -> ()
    %cst_6 = arith.constant dense<0.000000e+00> : vector<8x32xf32>
    %13 = tpu.matmul %12, %1, %cst_6 {dimension_numbers = #tpu.dot_dimension_numbers<[1], [1], [0], [0], [0, 0, 1, 0], [], []>} : vector<8x256xf32>, vector<32x256xf32>, vector<8x32xf32> -> vector<8x32xf32>
    "tpu.trace_stop"() : () -> ()
    %c0_7 = arith.constant 0 : index
    %c0_8 = arith.constant 0 : index
    %c0_9 = arith.constant 0 : index
    %14 = vector.load %arg3[%c0_7, %c0_8, %c0_9] : memref<1x8x32xf32, #tpu.memory_space<vmem>>, vector<1x8x32xf32>
    %15 = vector.shape_cast %14 : vector<1x8x32xf32> to vector<8x32xf32>
    %16 = vector.shape_cast %13 : vector<8x32xf32> to vector<1x8x32xf32>
    tpu.vector_store %arg3[%c0_7, %c0_8, %c0_9], %16 {strides = array<i32>} : memref<1x8x32xf32, #tpu.memory_space<vmem>>, vector<1x8x32xf32>,
    %17 = arith.mulf %13, %13 : vector<8x32xf32>
    %cst_10 = arith.constant dense<0.000000e+00> : vector<8xf32>
    %18 = vector.multi_reduction <add>, %17, %cst_10 [1] : vector<8x32xf32> to vector<8xf32>
    %19 = vector.shape_cast %18 : vector<8xf32> to vector<8x1xf32>
    %cst_11 = arith.constant 1.000000e-24 : f32
    %20 = vector.broadcast %cst_11 : f32 to vector<8x1xf32>
    %21 = arith.maximumf %19, %20 : vector<8x1xf32>
    %22 = math.rsqrt %21 : vector<8x1xf32>
    %23 = vector.broadcast %22 : vector<8x1xf32> to vector<8x32xf32>
    %24 = arith.mulf %13, %23 : vector<8x32xf32>
    %c0_12 = arith.constant 0 : index
    %c0_13 = arith.constant 0 : index
    %c0_14 = arith.constant 0 : index
    %25 = vector.load %arg4[%c0_12, %c0_13, %c0_14] : memref<1x8x32xf32, #tpu.memory_space<vmem>>, vector<1x8x32xf32>
    %26 = vector.shape_cast %25 : vector<1x8x32xf32> to vector<8x32xf32>
    %27 = vector.shape_cast %24 : vector<8x32xf32> to vector<1x8x32xf32>
    tpu.vector_store %arg4[%c0_12, %c0_13, %c0_14], %27 {strides = array<i32>} : memref<1x8x32xf32, #tpu.memory_space<vmem>>, vector<1x8x32xf32>,
    return
  }
  func.func @transform_0(%arg0: i32) -> (i32, i32, i32) {
    %c0_i32 = arith.constant 0 : i32
    %c0_i32_0 = arith.constant 0 : i32
    %c0_i32_1 = arith.constant 0 : i32
    return %arg0, %c0_i32, %c0_i32_0 : i32, i32, i32
  }
  func.func @transform_1(%arg0: i32) -> (i32, i32) {
    %c0_i32 = arith.constant 0 : i32
    %c0_i32_0 = arith.constant 0 : i32
    %c0_i32_1 = arith.constant 0 : i32
    return %c0_i32, %c0_i32_0 : i32, i32
  }
  func.func @transform_2(%arg0: i32) -> (i32, i32, i32) {
    %c0_i32 = arith.constant 0 : i32
    %c0_i32_0 = arith.constant 0 : i32
    %c0_i32_1 = arith.constant 0 : i32
    return %arg0, %c0_i32, %c0_i32_0 : i32, i32, i32
  }
  func.func @transform_3(%arg0: i32) -> (i32, i32, i32) {
    %c0_i32 = arith.constant 0 : i32
    %c0_i32_0 = arith.constant 0 : i32
    %c0_i32_1 = arith.constant 0 : i32
    return %arg0, %c0_i32, %c0_i32_0 : i32, i32, i32
  }
}

</mosaic_0001>

<llo_original>
// kernel: tpu_custom_call.1
$region0: #{tpu_custom_call.1}
  #allocation0 [shape = 'u32[]', space=smem, size = 0x4, offset = 0x4, fixed_abs, tag = 'smem constant byte address 0x4 - core index']
  #allocation1 [shape = 'u32[72,128]{1,0:T(1,128)}', space=vmem, size = 0x9000, scoped, tag = 'internal scratch']
  %s0 = inlined_call_operand.hbm [shape: f32[2,32,256], index: 0, kind: input, shape index: {}]
  %s1 = inlined_call_operand.hbm [shape: f32[8,32], index: 1, kind: input, shape index: {}]
  %s2 = inlined_call_operand.hbm [shape: f32[2,8,32], index: 2, kind: output, shape index: {0}]
  %s3 = inlined_call_operand.hbm [shape: f32[2,8,32], index: 3, kind: output, shape index: {1}]
  %4 = xla_tuple %s2, %s3
  %s5 = sld [smem:[#allocation0]]
  $region57: #{tpu_custom_call.1} parent=0
    _
  %s7 = ssub.s32 1, %s5
  %s8 = scalar_select 0, %s7, %s5
  $region1: #{tpu_custom_call.1} parent=0
    #allocation2 [shape = 'u8[65536]{0}', space=vmem, size = 0x10000, scoped, tag = 'input window, operand 0']
    #allocation3 [shape = 's32[2]{0}', space=sflag, size = 0x8, scoped, tag = 'scoped memory for tpu_custom_call.1']
    #allocation4 [shape = 's32[2]{0}', space=sflag, size = 0x8, scoped, tag = 'scoped memory for tpu_custom_call.1']
    #allocation5 [shape = 'u8[4096]{0}', space=vmem, size = 0x1000, scoped, tag = 'input window, operand 1, single buffered']
    #allocation6 [shape = 's32[1]{0}', space=sflag, size = 0x4, scoped, tag = 'scoped memory for tpu_custom_call.1']
    #allocation7 [shape = 'u8[8192]{0}', space=vmem, size = 0x2000, scoped, tag = 'output window, operand 0']
    #allocation8 [shape = 'u8[8192]{0}', space=vmem, size = 0x2000, scoped, tag = 'output window, operand 1']
    #allocation9 [shape = 's32[2]{0}', space=sflag, size = 0x8, scoped, tag = 'scoped memory for tpu_custom_call.1']
    %9 = vsyncpa [#allocation3], 0
    %s10 = scalar_lea.sflag [#allocation3], 1
    %11 = vsyncpa %s10, 0
    %12 = vsyncpa [#allocation6], 0
    %13 = vsyncpa [#allocation4], 0
    %s14 = scalar_lea.sflag [#allocation4], 1
    %15 = vsyncpa %s14, 0
    %16 = vsyncpa [#allocation9], 0
    %s17 = scalar_lea.sflag [#allocation9], 1
    %18 = vsyncpa %s17, 0
    loop: start=0, step=1, limit=4
    $region2: #{tpu_custom_call.1} parent=1 // loop_pre_header
      _
    $region3: #{tpu_custom_call.1} parent=1 // loop_header
      %s20 = sphi 0, %s24
      %p21 = scmp.ge.s32.totalorder %s20, 4
      %s30 = sphi 0, %s32
      %s33 = sphi 0, %s30
      %s34 = sphi 0, %s33
      %s50 = sphi 0, %s34
      %s54 = sphi 0, %s54
      %s56 = sphi 0, %s54
      %s57 = sphi 0, %s56
      %s71 = sphi 0, %s57
      %s77 = sphi 0, %s79
      %s80 = sphi 0, %s77
      %s81 = sphi 0, %s80
      %s97 = sphi 0, %s81
      %s103 = sphi 0, %s105
      %s106 = sphi 0, %s103
      %s107 = sphi 0, %s106
      %s123 = sphi 0, %s107
    $region4: #{tpu_custom_call.1} parent=1 // loop_header_branch
      %23 = sbr.rel (%p21) target = $region8
    $region5: #{tpu_custom_call.1} parent=1 // loop_body
      %s25 = ssub.s32 %s20, 1
      %s26 = ssub.s32 %s20, 2
      %s27 = sadd.s32 %s20, 1
      %s28 = ssub.s32 %s20, %s27
      %p29 = scmp.eq.s32.totalorder %s28, 0
      %s31 = sadd.s32 %s30, 1
      %s32 = scalar_select %p29, %s30, %s31
      %p35 = pneg %p29
      %p36 = scmp.eq.s32.totalorder %s20, 1
      %p37 = por %p35, %p36
      %p38 = scmp.ne.s32.totalorder %s30, %s33
      %p39 = scmp.eq.s32.totalorder %s20, 0
      %p40 = por %p38, %p39
      %p41 = scmp.ne.s32.totalorder %s30, %s33
      %p42 = scmp.eq.s32.totalorder %s25, 1
      %p43 = por %p41, %p42
      %p44 = scmp.ne.s32.totalorder %s33, %s34
      %p45 = scmp.eq.s32.totalorder %s25, 0
      %p46 = por %p44, %p45
      %p47 = scmp.ne.s32.totalorder %s33, %s34
      %p48 = scmp.eq.s32.totalorder %s26, 1
      %p49 = por %p47, %p48
      %p51 = scmp.ne.s32.totalorder %s34, %s50
      %p52 = scmp.eq.s32.totalorder %s26, 0
      %p53 = por %p51, %p52
      %s55 = sadd.s32 %s54, 1
      %p58 = scmp.eq.s32.totalorder %s20, 1
      %p59 = scmp.ne.s32.totalorder %s54, %s56
      %p60 = scmp.eq.s32.totalorder %s20, 0
      %p61 = por %p59, %p60
      %p62 = scmp.ne.s32.totalorder %s54, %s56
      %p63 = scmp.eq.s32.totalorder %s25, 1
      %p64 = por %p62, %p63
      %p65 = scmp.ne.s32.totalorder %s56, %s57
      %p66 = scmp.eq.s32.totalorder %s25, 0
      %p67 = por %p65, %p66
      %p68 = scmp.ne.s32.totalorder %s56, %s57
      %p69 = scmp.eq.s32.totalorder %s26, 1
      %p70 = por %p68, %p69
      %p72 = scmp.ne.s32.totalorder %s57, %s71
      %p73 = scmp.eq.s32.totalorder %s26, 0
      %p74 = por %p72, %p73
      %s75 = ssub.s32 %s20, %s27
      %p76 = scmp.eq.s32.totalorder %s75, 0
      %s78 = sadd.s32 %s77, 1
      %s79 = scalar_select %p76, %s77, %s78
      %p82 = pneg %p76
      %p83 = scmp.eq.s32.totalorder %s20, 1
      %p84 = por %p82, %p83
      %p85 = scmp.ne.s32.totalorder %s77, %s80
      %p86 = scmp.eq.s32.totalorder %s20, 0
      %p87 = por %p85, %p86
      %p88 = scmp.ne.s32.totalorder %s77, %s80
      %p89 = scmp.eq.s32.totalorder %s25, 1
      %p90 = por %p88, %p89
      %p91 = scmp.ne.s32.totalorder %s80, %s81
      %p92 = scmp.eq.s32.totalorder %s25, 0
      %p93 = por %p91, %p92
      %p94 = scmp.ne.s32.totalorder %s80, %s81
      %p95 = scmp.eq.s32.totalorder %s26, 1
      %p96 = por %p94, %p95
      %p98 = scmp.ne.s32.totalorder %s81, %s97
      %p99 = scmp.eq.s32.totalorder %s26, 0
      %p100 = por %p98, %p99
      %s101 = ssub.s32 %s20, %s27
      %p102 = scmp.eq.s32.totalorder %s101, 0
      %s104 = sadd.s32 %s103, 1
      %s105 = scalar_select %p102, %s103, %s104
      %p108 = pneg %p102
      %p109 = scmp.eq.s32.totalorder %s20, 1
      %p110 = por %p108, %p109
      %p111 = scmp.ne.s32.totalorder %s103, %s106
      %p112 = scmp.eq.s32.totalorder %s20, 0
      %p113 = por %p111, %p112
      %p114 = scmp.ne.s32.totalorder %s103, %s106
      %p115 = scmp.eq.s32.totalorder %s25, 1
      %p116 = por %p114, %p115
      %p117 = scmp.ne.s32.totalorder %s106, %s107
      %p118 = scmp.eq.s32.totalorder %s25, 0
      %p119 = por %p117, %p118
      %p120 = scmp.ne.s32.totalorder %s106, %s107
      %p121 = scmp.eq.s32.totalorder %s26, 1
      %p122 = por %p120, %p121
      %p124 = scmp.ne.s32.totalorder %s107, %s123
      %p125 = scmp.eq.s32.totalorder %s26, 0
      %p126 = por %p124, %p125
      %p127 = scmp.le.s32.totalorder 1, %s20
      %p128 = scmp.lt.s32.totalorder %s20, 3
      %p129 = pnand %p127, %p128
      %p130 = pneg %p129
      // Predicated region
      $region9: #{tpu_custom_call.1} parent=5 // pred_check
        _
      $region10: #{tpu_custom_call.1} parent=5 // pred_check_branch
        %132 = sbr.rel (%p129) target = $region12
      $region11: #{tpu_custom_call.1} parent=5 // pred_region
        %s133 = ssub.s32 %s20, 1
        // Predicated region
        $region13: #{tpu_custom_call.1} parent=11 // pred_check
          %p134 = pneg %p67
        $region14: #{tpu_custom_call.1} parent=11 // pred_check_branch
          %136 = sbr.rel (%p134) target = $region16
        $region15: #{tpu_custom_call.1} parent=11 // pred_region
          %138 = vsyncadd [#allocation6], 0
          %s140 = sshll.u32 %s1, 4
          %s141 = int_to_ptr.hbm [resolvable:$true] %s140
          %s142 = sshll.u32 [#allocation5], 4
          %s143 = int_to_ptr.vmem [resolvable:$true] %s142
          %145 = dma.hbm_to_vmem [thread:$0]  %s141, 128, %s143, [#allocation6]
        $region16: #{tpu_custom_call.1} parent=11 // pred_fallthru
          _
      $region12: #{tpu_custom_call.1} parent=5 // pred_fallthru
        _
      %p146 = scmp.lt.s32.totalorder %s20, 2
      // Predicated region
      $region17: #{tpu_custom_call.1} parent=5 // pred_check
        %p147 = pneg %p146
      $region18: #{tpu_custom_call.1} parent=5 // pred_check_branch
        %149 = sbr.rel (%p147) target = $region20
      $region19: #{tpu_custom_call.1} parent=5 // pred_region
        // Predicated region
        $region21: #{tpu_custom_call.1} parent=19 // pred_check
          %p150 = pneg %p40
        $region22: #{tpu_custom_call.1} parent=19 // pred_check_branch
          %152 = sbr.rel (%p150) target = $region24
        $region23: #{tpu_custom_call.1} parent=19 // pred_region
          %s153 = sand.u32 %s30, 1
          %s154 = scalar_lea.sflag [#allocation3], %s153
          %s155 = sand.u32 %s30, 1
          %s156 = smul.addr %s155, 64
          %s157 = scalar_lea.vmem [#allocation2], %s156
          %159 = vsyncadd %s154, 0
          %s160 = smul.addr %s20, 8
          %s161 = smul.addr %s160, 8
          %s162 = scalar_lea.hbm %s0, %s161
          %s163 = sshll.u32 %s162, 4
          %s164 = int_to_ptr.hbm [resolvable:$true] %s163
          %s165 = sshll.u32 %s157, 4
          %s166 = int_to_ptr.vmem [resolvable:$true] %s165
          %171 = dma.hbm_to_vmem [thread:$0]  %s164, 1024, %s166, %s154, 256, 256, 16
        $region24: #{tpu_custom_call.1} parent=19 // pred_fallthru
          _
      $region20: #{tpu_custom_call.1} parent=5 // pred_fallthru
        _
      %p172 = scmp.le.s32.totalorder 1, %s20
      %p173 = scmp.lt.s32.totalorder %s20, 3
      %p174 = pnand %p172, %p173
      %p175 = pneg %p174
      // Predicated region
      $region25: #{tpu_custom_call.1} parent=5 // pred_check
        _
      $region26: #{tpu_custom_call.1} parent=5 // pred_check_branch
        %177 = sbr.rel (%p174) target = $region28
      $region27: #{tpu_custom_call.1} parent=5 // pred_region
        %s178 = ssub.s32 %s20, 1
        %s179 = sand.u32 %s33, 1
        %s180 = scalar_lea.sflag [#allocation3], %s179
        %s181 = sand.u32 %s33, 1
        %s182 = smul.addr %s181, 64
        %s183 = scalar_lea.vmem [#allocation2], %s182
        // Predicated region
        $region29: #{tpu_custom_call.1} parent=27 // pred_check
          %p184 = pneg %p46
        $region30: #{tpu_custom_call.1} parent=27 // pred_check_branch
          %186 = sbr.rel (%p184) target = $region32
        $region31: #{tpu_custom_call.1} parent=27 // pred_region
          %188 = dma.done %s180, 1024
        $region32: #{tpu_custom_call.1} parent=27 // pred_fallthru
          _
        // Predicated region
        $region33: #{tpu_custom_call.1} parent=27 // pred_check
          %p189 = pneg %p67
        $region34: #{tpu_custom_call.1} parent=27 // pred_check_branch
          %191 = sbr.rel (%p189) target = $region36
        $region35: #{tpu_custom_call.1} parent=27 // pred_region
          %193 = dma.done [#allocation6], 128
        $region36: #{tpu_custom_call.1} parent=27 // pred_fallthru
          _
        %s194 = sand.u32 %s33, 1
        %s195 = scalar_lea.sflag [#allocation3], %s194
        %s196 = sand.u32 %s33, 1
        %s197 = smul.addr %s196, 64
        %s198 = scalar_lea.vmem [#allocation2], %s197
        %p199 = pneg %p46
        %p200 = pneg %p43
        %p201 = pneg %p67
        %p202 = pneg %p64
        %p203 = pneg %p93
        %p204 = pneg %p90
        %s205 = sand.u32 %s80, 1
        %s206 = scalar_lea.sflag [#allocation4], %s205
        %s207 = sand.u32 %s80, 1
        %s208 = smul.addr %s207, 8
        %s209 = scalar_lea.vmem [#allocation7], %s208
        %p210 = pneg %p119
        %p211 = pneg %p116
        %s212 = sand.u32 %s106, 1
        %s213 = scalar_lea.sflag [#allocation9], %s212
        %s214 = sand.u32 %s106, 1
        %s215 = smul.addr %s214, 8
        %s216 = scalar_lea.vmem [#allocation8], %s215
        %v217 = vld [vmem:[%s183] sm:$0xff]
        %v218 = vld [vmem:[%s183 + $0x8] sm:$0xff]
        %v219 = vld [vmem:[%s183 + $0x10] sm:$0xff]
        %v220 = vld [vmem:[%s183 + $0x18] sm:$0xff]
        %v221 = vld [vmem:[%s183 + $0x20] sm:$0xff]
        %v222 = vld [vmem:[%s183 + $0x28] sm:$0xff]
        %v223 = vld [vmem:[%s183 + $0x30] sm:$0xff]
        %v224 = vld [vmem:[%s183 + $0x38] sm:$0xff]
        %v225 = vld [vmem:[#allocation5] sm:$0xff]
        %vm226 = vcmask 261120
        %v228 = vsel %vm226, %v225, 0
        %230 = vmatpush.msra.mxu0 0.0
        %231 = vmatpush.msra.mxu0 0.0
        %232 = vmatpush.msra.mxu0 0.0
        %233 = vmatpush.msra.mxu0 0.0
        %234 = vmatpush.msra.mxu0 0.0
        %235 = vmatpush.msra.mxu0 0.0
        %236 = vmatpush.msra.mxu0 0.0
        %237 = vmatpush.msra.mxu0 0.0
        %238 = vmatpush.msra.mxu0 0.0
        %239 = vmatpush.msra.mxu0 0.0
        %240 = vmatpush.msra.mxu0 0.0
        %241 = vmatpush.msra.mxu0 0.0
        %242 = vmatpush.msra.mxu0 %v223
        %243 = vmatpush.msra.mxu0 %v221
        %244 = vmatpush.msra.mxu0 %v219
        %245 = vmatpush.msra.mxu0 %v217
        %246 = vmatmul.f32.gmra.mxu0 %v228
        %v247 = vpop.f32.mrf.mxu0
        %v248 = vadd.f32 0.0, %v247
        %249 = vdwg.mxu0
        %250 = vmatpush.msra.mxu0 0.0
        %251 = vmatpush.msra.mxu0 0.0
        %252 = vmatpush.msra.mxu0 0.0
        %253 = vmatpush.msra.mxu0 0.0
        %254 = vmatpush.msra.mxu0 0.0
        %255 = vmatpush.msra.mxu0 0.0
        %256 = vmatpush.msra.mxu0 0.0
        %257 = vmatpush.msra.mxu0 0.0
        %258 = vmatpush.msra.mxu0 0.0
        %259 = vmatpush.msra.mxu0 0.0
        %260 = vmatpush.msra.mxu0 0.0
        %261 = vmatpush.msra.mxu0 0.0
        %262 = vmatpush.msra.mxu0 %v224
        %263 = vmatpush.msra.mxu0 %v222
        %264 = vmatpush.msra.mxu0 %v220
        %265 = vmatpush.msra.mxu0 %v218
        %266 = vmatmul.f32.gmra.mxu0 %v228
        %v267 = vpop.f32.mrf.mxu0
        %v268 = vadd.f32 0.0, %v267
        %269 = vdwg.mxu0
        %v270 = vmax.f32 %v248, %v268
        %271 = vmax.xlane.f32.xlu0 %v270
        %v272 = vpop.xlane.xlu0 %271
        %v273 = vsub.f32 %v248, %v272
        %v274 = vsub.f32 %v268, %v272
        %v275 = vmul.f32 %v273, 1.442695
        %v276 = vpow.pop %v275
        %v277 = vmul.f32 %v274, 1.442695
        %v278 = vpow.pop %v277
        %v279 = vadd.f32 %v276, %v278
        %280 = vadd.xlane.f32.xlu0 %v279
        %v281 = vpop.xlane.xlu0 %280
        %v282 = vrcp.pop %v281
        %v283 = vmul.f32 %v281, %v282
        %v284 = vsub.f32 1.0, %v283
        %v285 = vmul.f32 %v282, %v284
        %v286 = vadd.f32 %v282, %v285
        %vm287 = vweird.f32 %v281
        %vm288 = vweird.f32 %v282
        %vm289 = vmor %vm287, %vm288
        %v290 = vsel %vm289, %v282, %v286
        %v291 = vand.u32 2147483647, %v281
        %vm292 = vcmp.eq.f32.partialorder %v291, 8.507059e+37
        %v293 = vand.u32 %v281, 2147483648
        %v294 = vor.u32 1.1754944e-38, %v293
        %v295 = vsel %vm292, %v294, %v290
        %v296 = vmul.f32 %v276, %v295
        %v297 = vmul.f32 %v278, %v295
        %298 = vmatpush.xpose.msra.mxu0 0.0
        %299 = vmatpush.xpose.msra.mxu0 0.0
        %300 = vmatpush.xpose.msra.mxu0 0.0
        %301 = vmatpush.xpose.msra.mxu0 0.0
        %302 = vmatpush.xpose.msra.mxu0 0.0
        %303 = vmatpush.xpose.msra.mxu0 0.0
        %304 = vmatpush.xpose.msra.mxu0 0.0
        %305 = vmatpush.xpose.msra.mxu0 0.0
        %306 = vmatpush.xpose.msra.mxu0 0.0
        %307 = vmatpush.xpose.msra.mxu0 0.0
        %308 = vmatpush.xpose.msra.mxu0 0.0
        %309 = vmatpush.xpose.msra.mxu0 0.0
        %310 = vmatpush.xpose.msra.mxu0 %v223
        %311 = vmatpush.xpose.msra.mxu0 %v221
        %312 = vmatpush.xpose.msra.mxu0 %v219
        %313 = vmatpush.xpose.msra.mxu0 %v217
        %314 = vmatmul.f32.gmra.mxu0 %v296
        %v315 = vpop.f32.mrf.mxu0
        %v316 = vadd.f32 0.0, %v315
        %317 = vdwg.mxu0
        %318 = vmatpush.xpose.msra.mxu0 0.0
        %319 = vmatpush.xpose.msra.mxu0 0.0
        %320 = vmatpush.xpose.msra.mxu0 0.0
        %321 = vmatpush.xpose.msra.mxu0 0.0
        %322 = vmatpush.xpose.msra.mxu0 0.0
        %323 = vmatpush.xpose.msra.mxu0 0.0
        %324 = vmatpush.xpose.msra.mxu0 0.0
        %325 = vmatpush.xpose.msra.mxu0 0.0
        %326 = vmatpush.xpose.msra.mxu0 0.0
        %327 = vmatpush.xpose.msra.mxu0 0.0
        %328 = vmatpush.xpose.msra.mxu0 0.0
        %329 = vmatpush.xpose.msra.mxu0 0.0
        %330 = vmatpush.xpose.msra.mxu0 %v224
        %331 = vmatpush.xpose.msra.mxu0 %v222
        %332 = vmatpush.xpose.msra.mxu0 %v220
        %333 = vmatpush.xpose.msra.mxu0 %v218
        %334 = vmatmul.f32.gmra.mxu0 %v297
        %v335 = vpop.f32.mrf.mxu0
        %v336 = vadd.f32 %v316, %v335
        %337 = vdwg.mxu0
        %338 = vst.msk [vmem:[%s209] sm:$0xff] %vm226, %v336
        %v339 = vmul.f32 %v336, %v336
        %v340 = vsel %vm226, %v339, 0.0
        %341 = vadd.xlane.f32.xlu0 %v340
        %v342 = vpop.xlane.xlu0 %341
        %v343 = vmax.f32 %v342, 1e-24
        %v344 = vrsqrt.pop %v343
        %v345 = vmul.f32 %v344, %v343
        %v346 = vmul.f32 %v345, %v344
        %v347 = vmul.f32 0.5, %v346
        %v348 = vsub.f32 1.5, %v347
        %v349 = vmul.f32 %v344, %v348
        %vm350 = vweird.f32 %v343
        %vm351 = vweird.f32 %v344
        %vm352 = vmor %vm350, %vm351
        %v353 = vsel %vm352, %v344, %v349
        %v354 = vmul.f32 %v336, %v353
        %355 = vst.msk [vmem:[%s216] sm:$0xff] %vm226, %v354
        %s356 = sand.u32 %s80, 1
        %s357 = scalar_lea.sflag [#allocation4], %s356
        %s358 = sand.u32 %s80, 1
        %s359 = smul.addr %s358, 8
        %s360 = scalar_lea.vmem [#allocation7], %s359
        %s361 = sand.u32 %s106, 1
        %s362 = scalar_lea.sflag [#allocation9], %s361
        %s363 = sand.u32 %s106, 1
        %s364 = smul.addr %s363, 8
        %s365 = scalar_lea.vmem [#allocation8], %s364
        // Predicated region
        $region37: #{tpu_custom_call.1} parent=27 // pred_check
          %p366 = pneg %p90
        $region38: #{tpu_custom_call.1} parent=27 // pred_check_branch
          %368 = sbr.rel (%p366) target = $region40
        $region39: #{tpu_custom_call.1} parent=27 // pred_region
          %370 = vsyncadd %s357, 0
          %s371 = smul.addr %s25, 8
          %s372 = scalar_lea.hbm %s2, %s371
          %s374 = sshll.u32 %s360, 4
          %s375 = int_to_ptr.vmem [resolvable:$true] %s374
          %s376 = sshll.u32 %s372, 4
          %s377 = int_to_ptr.hbm [resolvable:$true] %s376
          %379 = dma.vmem_to_hbm [thread:$0]  %s375, 128, %s377, %s357
        $region40: #{tpu_custom_call.1} parent=27 // pred_fallthru
          _
        // Predicated region
        $region41: #{tpu_custom_call.1} parent=27 // pred_check
          %p380 = pneg %p116
        $region42: #{tpu_custom_call.1} parent=27 // pred_check_branch
          %382 = sbr.rel (%p380) target = $region44
        $region43: #{tpu_custom_call.1} parent=27 // pred_region
          %384 = vsyncadd %s362, 0
          %s385 = smul.addr %s25, 8
          %s386 = scalar_lea.hbm %s3, %s385
          %s388 = sshll.u32 %s365, 4
          %s389 = int_to_ptr.vmem [resolvable:$true] %s388
          %s390 = sshll.u32 %s386, 4
          %s391 = int_to_ptr.hbm [resolvable:$true] %s390
          %393 = dma.vmem_to_hbm [thread:$0]  %s389, 128, %s391, %s362
        $region44: #{tpu_custom_call.1} parent=27 // pred_fallthru
          _
      $region28: #{tpu_custom_call.1} parent=5 // pred_fallthru
        _
      %p394 = scmp.le.s32.totalorder 2, %s20
      // Predicated region
      $region45: #{tpu_custom_call.1} parent=5 // pred_check
        %p395 = pneg %p394
      $region46: #{tpu_custom_call.1} parent=5 // pred_check_branch
        %397 = sbr.rel (%p395) target = $region48
      $region47: #{tpu_custom_call.1} parent=5 // pred_region
        %s398 = ssub.s32 %s20, 2
        // Predicated region
        $region49: #{tpu_custom_call.1} parent=47 // pred_check
          %p399 = pneg %p96
        $region50: #{tpu_custom_call.1} parent=47 // pred_check_branch
          %401 = sbr.rel (%p399) target = $region52
        $region51: #{tpu_custom_call.1} parent=47 // pred_region
          %s402 = sand.u32 %s81, 1
          %s403 = scalar_lea.sflag [#allocation4], %s402
          %s404 = sand.u32 %s81, 1
          %s405 = smul.addr %s404, 8
          %s406 = scalar_lea.vmem [#allocation7], %s405
          %408 = dma.done %s403, 128
        $region52: #{tpu_custom_call.1} parent=47 // pred_fallthru
          _
        // Predicated region
        $region53: #{tpu_custom_call.1} parent=47 // pred_check
          %p409 = pneg %p122
        $region54: #{tpu_custom_call.1} parent=47 // pred_check_branch
          %411 = sbr.rel (%p409) target = $region56
        $region55: #{tpu_custom_call.1} parent=47 // pred_region
          %s412 = sand.u32 %s107, 1
          %s413 = scalar_lea.sflag [#allocation9], %s412
          %s414 = sand.u32 %s107, 1
          %s415 = smul.addr %s414, 8
          %s416 = scalar_lea.vmem [#allocation8], %s415
          %418 = dma.done %s413, 128
        $region56: #{tpu_custom_call.1} parent=47 // pred_fallthru
          _
      $region48: #{tpu_custom_call.1} parent=5 // pred_fallthru
        _
    $region6: #{tpu_custom_call.1} parent=1 // loop_footer
      %s24 = sadd.s32 1, %s20
    $region7: #{tpu_custom_call.1} parent=1 // loop_footer_branch
      %19 = sbr.rel target = $region3
    $region8: #{tpu_custom_call.1} parent=1 // loop_exit
      _
    %419 = vsyncpa [#allocation3], 1
    %s420 = scalar_lea.sflag [#allocation3], 1
    %421 = vsyncpa %s420, 1
    %422 = vsyncpa [#allocation6], 1
    %423 = vsyncpa [#allocation4], 1
    %s424 = scalar_lea.sflag [#allocation4], 1
    %425 = vsyncpa %s424, 1
    %426 = vsyncpa [#allocation9], 1
    %s427 = scalar_lea.sflag [#allocation9], 1
    %428 = vsyncpa %s427, 1

</llo_original>
